<compile_context>
chip_gen: v6e
topology: v6e:2x2x1
jax: 0.10.0
libtpu: 0.0.40
codegen_flags: <defaults>
</compile_context>

<pallas_src>
import jax
import jax.numpy as jnp
from jax.experimental import pallas as pl
from jax.experimental.pallas import tpu as pltpu

LANES = 128
SUBLANES = 8
NACC = 4                         # independent (8,128) partial accumulators
ROW_ALIGN = NACC * SUBLANES      # 32: multiple of sublane pack for f32/bf16/i8
NCORES = 2                       # leading "parallel" axis (v7x megacore)
CHUNK_ROWS = 1024                # in-kernel compute chunk (512 KiB of f32)
MAX_BLOCK_BYTES = 4 << 20        # per-input DMA block target (4 MiB)


def _round_up(x, m):
    return pl.cdiv(x, m) * m


def _bce_elementwise(p, t):
    """Plain-JAX per-element BCE with the PyTorch -100 log clamp (f32)."""
    log_p = jnp.maximum(jnp.log(p), -100.0)
    log_1mp = jnp.maximum(jnp.log(1.0 - p), -100.0)
    return -(t * log_p + (1.0 - t) * log_1mp)


def _make_bce_sum_kernel(*, main_rows, row_tile, chunk_rows, n_chunks,
                         blocks_per_core, binary_targets):
    chunks_to_acc = chunk_rows // (NACC * SUBLANES)

    def kernel(p_ref, t_ref, psum_ref):
        c = pl.program_id(0)
        i = pl.program_id(1)

        @pl.when(i == 0)
        def _init():
            psum_ref[...] = jnp.zeros_like(psum_ref)

        # Global first row covered by this block, *unclamped*.  Blocks whose
        # index map was clamped (duplicates past the last real block) land
        # entirely at rows >= main_rows and are masked to zero below, so they
        # contribute nothing and nothing is double-counted.
        block_row0 = (c * blocks_per_core + i) * row_tile

        def neg_bce(p, t):
            if binary_targets:
                # Hard {0,1} labels: single log per element (opt-in).
                q = jnp.where(t > 0.5, p, 1.0 - p)
                return jnp.maximum(jnp.log(q), -100.0)
            log_p = jnp.maximum(jnp.log(p), -100.0)
            log_1mp = jnp.maximum(jnp.log(1.0 - p), -100.0)
            # == t*log_p + (1-t)*log_1mp with one fewer mul/sub (VALU trim).
            return log_1mp + t * (log_p - log_1mp)

        def do_chunk(r, masked):
            # Chunked loads keep the elementwise temporaries small even though
            # the DMA block itself is large.
            p = p_ref[pl.ds(r, chunk_rows), :].astype(jnp.float32)
            t = t_ref[pl.ds(r, chunk_rows), :].astype(jnp.float32)
            nbce = neg_bce(p, t)
            if masked:
                rows = (block_row0 + r) + jax.lax.broadcasted_iota(
                    jnp.int32, (chunk_rows, LANES), 0)
                # Garbage in the overhang region (log -> NaN/Inf) is selected
                # away, never multiplied, so it cannot poison the sum.
                nbce = jnp.where(rows < main_rows, nbce, 0.0)
            # NACC independent (8,128) partial chains -> 4-way VALU ILP.
            part = nbce.reshape(chunks_to_acc, NACC, SUBLANES, LANES).sum(axis=0)
            # Negated-BCE accumulated with subtraction => psum holds +sum(BCE).
            psum_ref[...] -= part.reshape(NACC * SUBLANES, LANES)

        def run(masked):
            if n_chunks == 1:
                do_chunk(0, masked)
            else:
                def body(j, carry):
                    do_chunk(pl.multiple_of(j * chunk_rows, chunk_rows), masked)
                    return carry
                jax.lax.fori_loop(0, n_chunks, body, 0)

        # Interior blocks skip the per-element mask entirely (hot path stays
        # lean); only edge / phantom blocks pay for the iota + compare + select.
        @pl.when(block_row0 + row_tile <= main_rows)
        def _interior():
            run(masked=False)

        @pl.when(block_row0 + row_tile > main_rows)
        def _edge():
            run(masked=True)

    return kernel


def _bce_sum_pallas(p2d, t2d, *, binary_targets=False):
    """Sum of per-element BCE over a (main_rows, 128) view, via Pallas."""
    main_rows = p2d.shape[0]
    isz_p = p2d.dtype.itemsize
    isz_t = t2d.dtype.itemsize
    isz = max(isz_p, isz_t)

    # Tile sizing: target ~4 MiB per input block (8192 f32 rows / 16384 bf16
    # rows), aligned to 32 rows (covers the 8/16/32 sublane packs).  The
    # explicit vmem_limit_bytes below makes this safe on v5e/v6e/v7x without
    # generation detection; the in-kernel chunk loop bounds compute scratch.
    max_rows = max(ROW_ALIGN, (MAX_BLOCK_BYTES // (LANES * isz)) // ROW_ALIGN * ROW_ALIGN)
    rows_per_core = pl.cdiv(main_rows, NCORES)
    row_tile = min(max_rows, _round_up(rows_per_core, ROW_ALIGN))
    chunk_rows = min(CHUNK_ROWS, row_tile)
    n_chunks = pl.cdiv(row_tile, chunk_rows)
    row_tile = n_chunks * chunk_rows            # keep row_tile % chunk_rows == 0

    total_blocks = pl.cdiv(main_rows, row_tile)
    ncores = min(NCORES, total_blocks)
    blocks_per_core = pl.cdiv(total_blocks, ncores)
    last_block = total_blocks - 1

    # 2 inputs x 2 pipeline buffers + generous headroom for in-kernel chunk
    # temporaries; capped well below every generation's physical VMEM.
    in_buf_bytes = 2 * row_tile * LANES * (isz_p + isz_t)
    vmem_limit = int(min(48 << 20, in_buf_bytes + (16 << 20)))

    n_elems = main_rows * LANES
    cost = pl.CostEstimate(
        flops=9 * n_elems,
        transcendentals=(1 if binary_targets else 2) * n_elems,
        bytes_accessed=n_elems * (isz_p + isz_t)
        + ncores * NACC * SUBLANES * LANES * 4,
    )

    kernel = _make_bce_sum_kernel(
        main_rows=main_rows, row_tile=row_tile, chunk_rows=chunk_rows,
        n_chunks=n_chunks, blocks_per_core=blocks_per_core,
        binary_targets=binary_targets)

    # Clamp the block index so every DMA stays in bounds even when the
    # rectangular (ncores x blocks_per_core) grid over-covers total_blocks;
    # the kernel's index masking zeroes the clamped duplicates' contribution.
    def in_map(c, i):
        return (jnp.minimum(c * blocks_per_core + i, last_block), 0)

    partials = pl.pallas_call(
        kernel,
        out_shape=jax.ShapeDtypeStruct((ncores * NACC * SUBLANES, LANES), jnp.float32),
        grid_spec=pltpu.PrefetchScalarGridSpec(
            num_scalar_prefetch=0,
            grid=(ncores, blocks_per_core),
            in_specs=[
                # v7x note: once tiles are this large, pipeline_mode=
                # pl.Buffered(3) is worth a sweep; default double-buffering
                # kept here (deeper buffering costs VMEM, expect 0-3%).
                pl.BlockSpec((row_tile, LANES), in_map),
                pl.BlockSpec((row_tile, LANES), in_map),
            ],
            out_specs=pl.BlockSpec((NACC * SUBLANES, LANES), lambda c, i: (c, 0)),
        ),
        compiler_params=pltpu.CompilerParams(
            dimension_semantics=("parallel", "arbitrary"),
            vmem_limit_bytes=vmem_limit,
        ),
        cost_estimate=cost,
    )(p2d, t2d)

    return jnp.sum(partials)


def focal_loss(inputs, targets, *, alpha=1.0, gamma=2.0, binary_targets=False):
    """Forward pass of FocalLoss (legacy reduce='none' => BCE reduction='mean')."""
    assert inputs.shape == targets.shape
    total = int(inputs.size)
    if total == 0:
        return jnp.float32(float("nan"))   # torch.mean over empty is NaN

    p_flat = jnp.reshape(inputs, (-1,))    # free bitcast, no HBM copy
    t_flat = jnp.reshape(targets, (-1,))
    main_rows, rem = divmod(total, LANES)

    bce_sum = jnp.float32(0.0)
    if rem:
        # <128-element lane tail handled in plain JAX (negligible work).
        tp = p_flat[main_rows * LANES:].astype(jnp.float32)
        tt = t_flat[main_rows * LANES:].astype(jnp.float32)
        bce_sum = bce_sum + jnp.sum(_bce_elementwise(tp, tt))

    if main_rows > 0:
        if rem:
            # Only taken when total % 128 != 0 (rare for NCHW tensors); this
            # prefix slice may materialize a copy.  The common path below is a
            # pure reshape with zero extra HBM traffic.
            p_main = p_flat[: main_rows * LANES]
            t_main = t_flat[: main_rows * LANES]
        else:
            p_main, t_main = p_flat, t_flat
        p2d = p_main.reshape(main_rows, LANES)
        t2d = t_main.reshape(main_rows, LANES)
        bce_sum = bce_sum + _bce_sum_pallas(p2d, t2d, binary_targets=binary_targets)

    bce_mean = bce_sum / jnp.float32(total)       # BCELoss reduction='mean'
    pt = jnp.exp(-bce_mean)
    return jnp.float32(alpha) * (1.0 - pt) ** jnp.float32(gamma) * bce_mean


def _reference(inputs, targets, alpha=1.0, gamma=2.0):
    p = inputs.astype(jnp.float32)
    t = targets.astype(jnp.float32)
    bce_mean = jnp.mean(_bce_elementwise(p, t))
    pt = jnp.exp(-bce_mean)
    return alpha * (1.0 - pt) ** gamma * bce_mean


if __name__ == "__main__":
    key = jax.random.PRNGKey(0)
    k1, k2, k3, k4, k5, k6 = jax.random.split(key, 6)

    # Primary example: NCHW probabilities / {0,1} labels at small shapes.
    x = jax.nn.sigmoid(jax.random.normal(k1, (2, 4, 16, 16), dtype=jnp.float32))
    y = (jax.random.uniform(k2, (2, 4, 16, 16)) > 0.5).astype(jnp.float32)
    loss = focal_loss(x, y)
    jax.block_until_ready(loss)
    ref = _reference(x, y)
    assert jnp.allclose(loss, ref, rtol=2e-5, atol=1e-6), (loss, ref)

    # Opt-in binary-label fast path (same math for hard labels).
    loss_bin = focal_loss(x, y, binary_targets=True)
    jax.block_until_ready(loss_bin)
    assert jnp.allclose(loss_bin, ref, rtol=2e-5, atol=1e-6), (loss_bin, ref)

    # Larger check: exercises the multi-core grid and the in-kernel chunk loop
    # (soft labels, so the two-log path is what is being validated).
    x2 = jax.nn.sigmoid(jax.random.normal(k3, (8, 16, 64, 64), dtype=jnp.float32))
    y2 = jax.random.uniform(k4, (8, 16, 64, 64), dtype=jnp.float32)
    loss2 = focal_loss(x2, y2)
    jax.block_until_ready(loss2)
    ref2 = _reference(x2, y2)
    assert jnp.allclose(loss2, ref2, rtol=2e-4, atol=1e-6), (loss2, ref2)

    # Ragged check: flat size not a multiple of 128 (edge masking + lane tail).
    x3 = jax.nn.sigmoid(jax.random.normal(k5, (5, 3, 7, 11), dtype=jnp.float32))
    y3 = (jax.random.uniform(k6, (5, 3, 7, 11)) > 0.5).astype(jnp.float32)
    loss3 = focal_loss(x3, y3)
    jax.block_until_ready(loss3)
    ref3 = _reference(x3, y3)
    assert jnp.allclose(loss3, ref3, rtol=2e-5, atol=1e-6), (loss3, ref3)

    print("KERNEL_OK")
</pallas_src>

<mosaic_0001>
module attributes {stable_mosaic.version = 11 : i64} {
  func.func @kernel(%arg0: i32, %arg1: i32, %arg2: memref<32x128xf32, #tpu.memory_space<vmem>>, %arg3: memref<32x128xf32, #tpu.memory_space<vmem>>, %arg4: memref<32x128xf32, #tpu.memory_space<vmem>>) attributes {dimension_semantics = [#tpu.dimension_semantics<parallel>, #tpu.dimension_semantics<arbitrary>], iteration_bounds = array<i64: 1, 1>, scalar_prefetch = 0 : i64, scratch_operands = 0 : i64, tpu.core_type = #tpu.core_type<tc>, window_params = [{transform_indices = @transform_0, window_bounds = array<i64: 32, 128>}, {transform_indices = @transform_1, window_bounds = array<i64: 32, 128>}, {transform_indices = @transform_2, window_bounds = array<i64: 32, 128>}]} {
    %c0_i32 = arith.constant 0 : i32
    %0 = arith.cmpi eq, %arg1, %c0_i32 : i32
    %1 = arith.extui %0 : i1 to i32
    %c0_i32_0 = arith.constant 0 : i32
    %2 = arith.cmpi ne, %1, %c0_i32_0 : i32
    scf.if %2 {
      %cst = arith.constant 0.000000e+00 : f32
      %14 = vector.broadcast %cst : f32 to vector<32x128xf32>
      %c0 = arith.constant 0 : index
      %c0_6 = arith.constant 0 : index
      %15 = vector.load %arg4[%c0, %c0_6] : memref<32x128xf32, #tpu.memory_space<vmem>>, vector<32x128xf32>
      tpu.vector_store %arg4[%c0, %c0_6], %14 {strides = array<i32>} : memref<32x128xf32, #tpu.memory_space<vmem>>, vector<32x128xf32>,
    } else {
    }
    %c1_i32 = arith.constant 1 : i32
    %3 = arith.muli %arg0, %c1_i32 : i32
    %4 = arith.addi %3, %arg1 : i32
    %c32_i32 = arith.constant 32 : i32
    %5 = arith.muli %4, %c32_i32 : i32
    %c32_i32_1 = arith.constant 32 : i32
    %6 = arith.addi %5, %c32_i32_1 : i32
    %c16_i32 = arith.constant 16 : i32
    %7 = arith.cmpi sle, %6, %c16_i32 : i32
    %8 = arith.extui %7 : i1 to i32
    %c0_i32_2 = arith.constant 0 : i32
    %9 = arith.cmpi ne, %8, %c0_i32_2 : i32
    scf.if %9 {
      %c0 = arith.constant 0 : index
      %c0_6 = arith.constant 0 : index
      %14 = vector.load %arg2[%c0, %c0_6] : memref<32x128xf32, #tpu.memory_space<vmem>>, vector<32x128xf32>
      %c0_7 = arith.constant 0 : index
      %c0_8 = arith.constant 0 : index
      %15 = vector.load %arg3[%c0_7, %c0_8] : memref<32x128xf32, #tpu.memory_space<vmem>>, vector<32x128xf32>
      %16 = math.log %14 : vector<32x128xf32>
      %cst = arith.constant -1.000000e+02 : f32
      %17 = vector.broadcast %cst : f32 to vector<32x128xf32>
      %18 = arith.maximumf %16, %17 : vector<32x128xf32>
      %cst_9 = arith.constant 1.000000e+00 : f32
      %19 = vector.broadcast %cst_9 : f32 to vector<32x128xf32>
      %20 = arith.subf %19, %14 : vector<32x128xf32>
      %21 = math.log %20 : vector<32x128xf32>
      %cst_10 = arith.constant -1.000000e+02 : f32
      %22 = vector.broadcast %cst_10 : f32 to vector<32x128xf32>
      %23 = arith.maximumf %21, %22 : vector<32x128xf32>
      %24 = arith.subf %18, %23 : vector<32x128xf32>
      %25 = arith.mulf %15, %24 : vector<32x128xf32>
      %26 = arith.addf %23, %25 : vector<32x128xf32>
      %27 = vector.shape_cast %26 : vector<32x128xf32> to vector<1x4x8x128xf32>
      %cst_11 = arith.constant dense<0.000000e+00> : vector<4x8x128xf32>
      %28 = vector.multi_reduction <add>, %27, %cst_11 [0] : vector<1x4x8x128xf32> to vector<4x8x128xf32>
      %c0_12 = arith.constant 0 : index
      %c0_13 = arith.constant 0 : index
      %29 = vector.load %arg4[%c0_12, %c0_13] : memref<32x128xf32, #tpu.memory_space<vmem>>, vector<32x128xf32>
      %30 = vector.shape_cast %28 : vector<4x8x128xf32> to vector<32x128xf32>
      %31 = arith.subf %29, %30 : vector<32x128xf32>
      %c0_14 = arith.constant 0 : index
      %c0_15 = arith.constant 0 : index
      %32 = vector.load %arg4[%c0_14, %c0_15] : memref<32x128xf32, #tpu.memory_space<vmem>>, vector<32x128xf32>
      tpu.vector_store %arg4[%c0_14, %c0_15], %31 {strides = array<i32>} : memref<32x128xf32, #tpu.memory_space<vmem>>, vector<32x128xf32>,
    } else {
    }
    %c32_i32_3 = arith.constant 32 : i32
    %10 = arith.addi %5, %c32_i32_3 : i32
    %c16_i32_4 = arith.constant 16 : i32
    %11 = arith.cmpi sgt, %10, %c16_i32_4 : i32
    %12 = arith.extui %11 : i1 to i32
    %c0_i32_5 = arith.constant 0 : i32
    %13 = arith.cmpi ne, %12, %c0_i32_5 : i32
    scf.if %13 {
      %c0 = arith.constant 0 : index
      %c0_6 = arith.constant 0 : index
      %14 = vector.load %arg2[%c0, %c0_6] : memref<32x128xf32, #tpu.memory_space<vmem>>, vector<32x128xf32>
      %c0_7 = arith.constant 0 : index
      %c0_8 = arith.constant 0 : index
      %15 = vector.load %arg3[%c0_7, %c0_8] : memref<32x128xf32, #tpu.memory_space<vmem>>, vector<32x128xf32>
      %16 = math.log %14 : vector<32x128xf32>
      %cst = arith.constant -1.000000e+02 : f32
      %17 = vector.broadcast %cst : f32 to vector<32x128xf32>
      %18 = arith.maximumf %16, %17 : vector<32x128xf32>
      %cst_9 = arith.constant 1.000000e+00 : f32
      %19 = vector.broadcast %cst_9 : f32 to vector<32x128xf32>
      %20 = arith.subf %19, %14 : vector<32x128xf32>
      %21 = math.log %20 : vector<32x128xf32>
      %cst_10 = arith.constant -1.000000e+02 : f32
      %22 = vector.broadcast %cst_10 : f32 to vector<32x128xf32>
      %23 = arith.maximumf %21, %22 : vector<32x128xf32>
      %24 = arith.subf %18, %23 : vector<32x128xf32>
      %25 = arith.mulf %15, %24 : vector<32x128xf32>
      %26 = arith.addf %23, %25 : vector<32x128xf32>
      %c0_i32_11 = arith.constant 0 : i32
      %27 = arith.addi %5, %c0_i32_11 : i32
      %28 = tpu.iota {dimensions = array<i32: 0>} : vector<32x128xi32>
      %29 = vector.broadcast %27 : i32 to vector<32x128xi32>
      %30 = arith.addi %29, %28 : vector<32x128xi32>
      %c16_i32_12 = arith.constant 16 : i32
      %31 = vector.broadcast %c16_i32_12 : i32 to vector<32x128xi32>
      %32 = arith.cmpi slt, %30, %31 : vector<32x128xi32>
      %cst_13 = arith.constant 0.000000e+00 : f32
      %33 = vector.broadcast %cst_13 : f32 to vector<32x128xf32>
      %34 = arith.select %32, %26, %33 : vector<32x128xi1>, vector<32x128xf32>
      %35 = vector.shape_cast %34 : vector<32x128xf32> to vector<1x4x8x128xf32>
      %cst_14 = arith.constant dense<0.000000e+00> : vector<4x8x128xf32>
      %36 = vector.multi_reduction <add>, %35, %cst_14 [0] : vector<1x4x8x128xf32> to vector<4x8x128xf32>
      %c0_15 = arith.constant 0 : index
      %c0_16 = arith.constant 0 : index
      %37 = vector.load %arg4[%c0_15, %c0_16] : memref<32x128xf32, #tpu.memory_space<vmem>>, vector<32x128xf32>
      %38 = vector.shape_cast %36 : vector<4x8x128xf32> to vector<32x128xf32>
      %39 = arith.subf %37, %38 : vector<32x128xf32>
      %c0_17 = arith.constant 0 : index
      %c0_18 = arith.constant 0 : index
      %40 = vector.load %arg4[%c0_17, %c0_18] : memref<32x128xf32, #tpu.memory_space<vmem>>, vector<32x128xf32>
      tpu.vector_store %arg4[%c0_17, %c0_18], %39 {strides = array<i32>} : memref<32x128xf32, #tpu.memory_space<vmem>>, vector<32x128xf32>,
    } else {
    }
    return
  }
  func.func @transform_0(%arg0: i32, %arg1: i32) -> (i32, i32) {
    %c1_i32 = arith.constant 1 : i32
    %0 = arith.muli %arg0, %c1_i32 : i32
    %1 = arith.addi %0, %arg1 : i32
    %c0_i32 = arith.constant 0 : i32
    %2 = arith.minsi %1, %c0_i32 : i32
    %c0_i32_0 = arith.constant 0 : i32
    %c0_i32_1 = arith.constant 0 : i32
    return %2, %c0_i32_0 : i32, i32
  }
  func.func @transform_1(%arg0: i32, %arg1: i32) -> (i32, i32) {
    %c1_i32 = arith.constant 1 : i32
    %0 = arith.muli %arg0, %c1_i32 : i32
    %1 = arith.addi %0, %arg1 : i32
    %c0_i32 = arith.constant 0 : i32
    %2 = arith.minsi %1, %c0_i32 : i32
    %c0_i32_0 = arith.constant 0 : i32
    %c0_i32_1 = arith.constant 0 : i32
    return %2, %c0_i32_0 : i32, i32
  }
  func.func @transform_2(%arg0: i32, %arg1: i32) -> (i32, i32) {
    %c0_i32 = arith.constant 0 : i32
    %c0_i32_0 = arith.constant 0 : i32
    return %arg0, %c0_i32 : i32, i32
  }
}

</mosaic_0001>

<llo_original>
// kernel: tpu_custom_call.1
$region0: #{tpu_custom_call.1}
  #allocation0 [shape = 'u32[]', space=smem, size = 0x4, offset = 0x4, fixed_abs, tag = 'smem constant byte address 0x4 - core index']
  #allocation1 [shape = 'u32[144,128]{1,0:T(1,128)}', space=vmem, size = 0x12000, scoped, tag = 'internal scratch']
  %s0 = inlined_call_operand.hbm [shape: f32[16,128], index: 0, kind: input, shape index: {}]
  %s1 = inlined_call_operand.hbm [shape: f32[16,128], index: 1, kind: input, shape index: {}]
  %s2 = inlined_call_operand.hbm [shape: f32[32,128], index: 2, kind: output, shape index: {}]
  %s3 = sld [smem:[#allocation0]]
  $region38: #{tpu_custom_call.1} parent=0
    _
  %s5 = ssub.s32 1, %s3
  %s6 = scalar_select 0, %s5, %s3
  $region1: #{tpu_custom_call.1} parent=0
    #allocation2 [shape = 'u8[16384]{0}', space=vmem, size = 0x4000, scoped, tag = 'input window, operand 0, single buffered']
    #allocation3 [shape = 's32[1]{0}', space=sflag, size = 0x4, scoped, tag = 'scoped memory for tpu_custom_call.1']
    #allocation4 [shape = 's32[1]{0}', space=sflag, size = 0x4, scoped, tag = 'scoped memory for tpu_custom_call.1']
    #allocation5 [shape = 'u8[16384]{0}', space=vmem, size = 0x4000, scoped, tag = 'input window, operand 1, single buffered']
    #allocation6 [shape = 's32[1]{0}', space=sflag, size = 0x4, scoped, tag = 'scoped memory for tpu_custom_call.1']
    #allocation7 [shape = 'u8[16384]{0}', space=vmem, size = 0x4000, scoped, tag = 'output window, operand 0, single buffered']
    %7 = vsyncpa [#allocation3], 0
    %8 = vsyncpa [#allocation6], 0
    %9 = vsyncpa [#allocation4], 0
    // Predicated region
    $region2: #{tpu_custom_call.1} parent=1 // pred_check
      _
    $region3: #{tpu_custom_call.1} parent=1 // pred_check_branch
      %11 = sbr.rel (0) target = $region5
    $region4: #{tpu_custom_call.1} parent=1 // pred_region
      %s12 = sadd.s32 0, 0
      %p13 = scmp.lt.s32.totalorder %s12, 0
      %s14 = scalar_select %p13, %s12, 0
      %s15 = smul.u32 4, %s14
      %s16 = ssub.s32 2, %s15
      %s17 = smul.u32 128, %s16
      %s19 = ssub.s32 512, %s17
      %20 = vsyncadd [#allocation3], %s19
      %p21 = scmp.ne.s32.totalorder 0, %s17
      %s22 = smul.addr %s15, 128
      %s23 = scalar_lea.hbm %s0, %s22
      %s24 = smul.u32 8, %s16
      %s25 = sshll.u32 [#allocation2], 4
      %s26 = int_to_ptr.vmem [resolvable:$true] %s25
      %s27 = sshll.u32 %s24, 4
      %31 = dma.hbm_to_vmem [thread:$0]  (%p21), %s23, %s27, %s26, [#allocation3], 128, 128, 8
    $region5: #{tpu_custom_call.1} parent=1 // pred_fallthru
      _
    // Predicated region
    $region6: #{tpu_custom_call.1} parent=1 // pred_check
      _
    $region7: #{tpu_custom_call.1} parent=1 // pred_check_branch
      %33 = sbr.rel (0) target = $region9
    $region8: #{tpu_custom_call.1} parent=1 // pred_region
      %s34 = sadd.s32 0, 0
      %p35 = scmp.lt.s32.totalorder %s34, 0
      %s36 = scalar_select %p35, %s34, 0
      %s37 = smul.u32 4, %s36
      %s38 = ssub.s32 2, %s37
      %s39 = smul.u32 128, %s38
      %s41 = ssub.s32 512, %s39
      %42 = vsyncadd [#allocation6], %s41
      %p43 = scmp.ne.s32.totalorder 0, %s39
      %s44 = smul.addr %s37, 128
      %s45 = scalar_lea.hbm %s1, %s44
      %s46 = smul.u32 8, %s38
      %s47 = sshll.u32 [#allocation5], 4
      %s48 = int_to_ptr.vmem [resolvable:$true] %s47
      %s49 = sshll.u32 %s46, 4
      %53 = dma.hbm_to_vmem [thread:$0]  (%p43), %s45, %s49, %s48, [#allocation6], 128, 128, 8
    $region9: #{tpu_custom_call.1} parent=1 // pred_fallthru
      _
    // Predicated region
    $region10: #{tpu_custom_call.1} parent=1 // pred_check
      _
    $region11: #{tpu_custom_call.1} parent=1 // pred_check_branch
      %55 = sbr.rel (0) target = $region13
    $region12: #{tpu_custom_call.1} parent=1 // pred_region
      %56 = dma.done [#allocation3], 512
    $region13: #{tpu_custom_call.1} parent=1 // pred_fallthru
      _
    // Predicated region
    $region14: #{tpu_custom_call.1} parent=1 // pred_check
      _
    $region15: #{tpu_custom_call.1} parent=1 // pred_check_branch
      %58 = sbr.rel (0) target = $region17
    $region16: #{tpu_custom_call.1} parent=1 // pred_region
      %59 = dma.done [#allocation6], 512
    $region17: #{tpu_custom_call.1} parent=1 // pred_fallthru
      _
    %s60 = sadd.s32 0, 0
    %p61 = scmp.lt.s32.totalorder %s60, 0
    %s62 = scalar_select %p61, %s60, 0
    %s63 = smul.u32 4, %s62
    %s64 = ssub.s32 2, %s63
    %s65 = smul.u32 128, %s64
    %s66 = sadd.s32 0, 0
    %p67 = scmp.lt.s32.totalorder %s66, 0
    %s68 = scalar_select %p67, %s66, 0
    %s69 = smul.u32 4, %s68
    %s70 = ssub.s32 2, %s69
    %s71 = smul.u32 128, %s70
    %p72 = scmp.eq.s32.totalorder 0, 0
    // Predicated region
    $region18: #{tpu_custom_call.1} parent=1 // pred_check
      %p73 = pneg %p72
    $region19: #{tpu_custom_call.1} parent=1 // pred_check_branch
      %75 = sbr.rel (%p73) target = $region21
    $region20: #{tpu_custom_call.1} parent=1 // pred_region
      %76 = vst [vmem:[#allocation7] sm:$0xff] 0.0
      %77 = vst [vmem:[#allocation7 + $0x8] sm:$0xff] 0.0
      %78 = vst [vmem:[#allocation7 + $0x10] sm:$0xff] 0.0
      %79 = vst [vmem:[#allocation7 + $0x18] sm:$0xff] 0.0
    $region21: #{tpu_custom_call.1} parent=1 // pred_fallthru
      _
    %s80 = sadd.s32 0, 0
    %s81 = smul.u32 %s80, 32
    %s82 = sadd.s32 %s81, 32
    %p83 = scmp.le.s32.totalorder %s82, 16
    // Predicated region
    $region22: #{tpu_custom_call.1} parent=1 // pred_check
      %p84 = pneg %p83
    $region23: #{tpu_custom_call.1} parent=1 // pred_check_branch
      %86 = sbr.rel (%p84) target = $region25
    $region24: #{tpu_custom_call.1} parent=1 // pred_region
      %v87 = vld [vmem:[#allocation2] sm:$0xff]
      %v88 = vld [vmem:[#allocation2 + $0x8] sm:$0xff]
      %v89 = vld [vmem:[#allocation2 + $0x10] sm:$0xff]
      %v90 = vld [vmem:[#allocation2 + $0x18] sm:$0xff]
      %v91 = vld [vmem:[#allocation5] sm:$0xff]
      %v92 = vld [vmem:[#allocation5 + $0x8] sm:$0xff]
      %v93 = vld [vmem:[#allocation5 + $0x10] sm:$0xff]
      %v94 = vld [vmem:[#allocation5 + $0x18] sm:$0xff]
      %v95 = vlog2.pop %v87
      %v96 = vmul.f32 %v95, 0.6931472
      %v97 = vlog2.pop %v88
      %v98 = vmul.f32 %v97, 0.6931472
      %v99 = vlog2.pop %v89
      %v100 = vmul.f32 %v99, 0.6931472
      %v101 = vlog2.pop %v90
      %v102 = vmul.f32 %v101, 0.6931472
      %v103 = vmax.f32 %v96, -100.0
      %v104 = vmax.f32 %v98, -100.0
      %v105 = vmax.f32 %v100, -100.0
      %v106 = vmax.f32 %v102, -100.0
      %v107 = vsub.f32 1.0, %v87
      %v108 = vsub.f32 1.0, %v88
      %v109 = vsub.f32 1.0, %v89
      %v110 = vsub.f32 1.0, %v90
      %v111 = vlog2.pop %v107
      %v112 = vmul.f32 %v111, 0.6931472
      %v113 = vlog2.pop %v108
      %v114 = vmul.f32 %v113, 0.6931472
      %v115 = vlog2.pop %v109
      %v116 = vmul.f32 %v115, 0.6931472
      %v117 = vlog2.pop %v110
      %v118 = vmul.f32 %v117, 0.6931472
      %v119 = vmax.f32 %v112, -100.0
      %v120 = vmax.f32 %v114, -100.0
      %v121 = vmax.f32 %v116, -100.0
      %v122 = vmax.f32 %v118, -100.0
      %v123 = vsub.f32 %v103, %v119
      %v124 = vsub.f32 %v104, %v120
      %v125 = vsub.f32 %v105, %v121
      %v126 = vsub.f32 %v106, %v122
      %v127 = vmul.f32 %v91, %v123
      %v128 = vmul.f32 %v92, %v124
      %v129 = vmul.f32 %v93, %v125
      %v130 = vmul.f32 %v94, %v126
      %v131 = vadd.f32 %v119, %v127
      %v132 = vadd.f32 %v120, %v128
      %v133 = vadd.f32 %v121, %v129
      %v134 = vadd.f32 %v122, %v130
      %v135 = vadd.f32 %v131, 0.0
      %v136 = vadd.f32 %v132, 0.0
      %v137 = vadd.f32 %v133, 0.0
      %v138 = vadd.f32 %v134, 0.0
      %v139 = vld [vmem:[#allocation7] sm:$0xff]
      %v140 = vld [vmem:[#allocation7 + $0x8] sm:$0xff]
      %v141 = vld [vmem:[#allocation7 + $0x10] sm:$0xff]
      %v142 = vld [vmem:[#allocation7 + $0x18] sm:$0xff]
      %v143 = vsub.f32 %v139, %v135
      %v144 = vsub.f32 %v140, %v136
      %v145 = vsub.f32 %v141, %v137
      %v146 = vsub.f32 %v142, %v138
      %147 = vst [vmem:[#allocation7] sm:$0xff] %v143
      %148 = vst [vmem:[#allocation7 + $0x8] sm:$0xff] %v144
      %149 = vst [vmem:[#allocation7 + $0x10] sm:$0xff] %v145
      %150 = vst [vmem:[#allocation7 + $0x18] sm:$0xff] %v146
    $region25: #{tpu_custom_call.1} parent=1 // pred_fallthru
      _
    %p151 = scmp.gt.s32.totalorder %s82, 16
    // Predicated region
    $region26: #{tpu_custom_call.1} parent=1 // pred_check
      %p152 = pneg %p151
    $region27: #{tpu_custom_call.1} parent=1 // pred_check_branch
      %154 = sbr.rel (%p152) target = $region29
    $region28: #{tpu_custom_call.1} parent=1 // pred_region
      %v155 = vld [vmem:[#allocation2] sm:$0xff]
      %v156 = vld [vmem:[#allocation2 + $0x8] sm:$0xff]
      %v157 = vld [vmem:[#allocation2 + $0x10] sm:$0xff]
      %v158 = vld [vmem:[#allocation2 + $0x18] sm:$0xff]
      %v159 = vld [vmem:[#allocation5] sm:$0xff]
      %v160 = vld [vmem:[#allocation5 + $0x8] sm:$0xff]
      %v161 = vld [vmem:[#allocation5 + $0x10] sm:$0xff]
      %v162 = vld [vmem:[#allocation5 + $0x18] sm:$0xff]
      %v163 = vlog2.pop %v155
      %v164 = vmul.f32 %v163, 0.6931472
      %v165 = vlog2.pop %v156
      %v166 = vmul.f32 %v165, 0.6931472
      %v167 = vlog2.pop %v157
      %v168 = vmul.f32 %v167, 0.6931472
      %v169 = vlog2.pop %v158
      %v170 = vmul.f32 %v169, 0.6931472
      %v171 = vmax.f32 %v164, -100.0
      %v172 = vmax.f32 %v166, -100.0
      %v173 = vmax.f32 %v168, -100.0
      %v174 = vmax.f32 %v170, -100.0
      %v175 = vsub.f32 1.0, %v155
      %v176 = vsub.f32 1.0, %v156
      %v177 = vsub.f32 1.0, %v157
      %v178 = vsub.f32 1.0, %v158
      %v179 = vlog2.pop %v175
      %v180 = vmul.f32 %v179, 0.6931472
      %v181 = vlog2.pop %v176
      %v182 = vmul.f32 %v181, 0.6931472
      %v183 = vlog2.pop %v177
      %v184 = vmul.f32 %v183, 0.6931472
      %v185 = vlog2.pop %v178
      %v186 = vmul.f32 %v185, 0.6931472
      %v187 = vmax.f32 %v180, -100.0
      %v188 = vmax.f32 %v182, -100.0
      %v189 = vmax.f32 %v184, -100.0
      %v190 = vmax.f32 %v186, -100.0
      %v191 = vsub.f32 %v171, %v187
      %v192 = vsub.f32 %v172, %v188
      %v193 = vsub.f32 %v173, %v189
      %v194 = vsub.f32 %v174, %v190
      %v195 = vmul.f32 %v159, %v191
      %v196 = vmul.f32 %v160, %v192
      %v197 = vmul.f32 %v161, %v193
      %v198 = vmul.f32 %v162, %v194
      %v199 = vadd.f32 %v187, %v195
      %v200 = vadd.f32 %v188, %v196
      %v201 = vadd.f32 %v189, %v197
      %v202 = vadd.f32 %v190, %v198
      %v203 = vlaneseq
      %v204 = vshrl.u32 %v203, 7
      %v205 = vadd.s32 %v204, 8
      %v206 = vadd.s32 %v204, 16
      %v207 = vadd.s32 %v204, 24
      %v208 = vstv %s81
      %v209 = vadd.s32 %v208, %v204
      %v210 = vadd.s32 %v208, %v205
      %v211 = vadd.s32 %v208, %v206
      %v212 = vadd.s32 %v208, %v207
      %vm213 = vcmp.lt.s32.totalorder %v209, 16
      %vm214 = vcmp.lt.s32.totalorder %v210, 16
      %vm215 = vcmp.lt.s32.totalorder %v211, 16
      %vm216 = vcmp.lt.s32.totalorder %v212, 16
      %v217 = vsel %vm213, %v199, 0.0
      %v218 = vsel %vm214, %v200, 0.0
      %v219 = vsel %vm215, %v201, 0.0
      %v220 = vsel %vm216, %v202, 0.0
      %v221 = vadd.f32 %v217, 0.0
      %v222 = vadd.f32 %v218, 0.0
      %v223 = vadd.f32 %v219, 0.0
      %v224 = vadd.f32 %v220, 0.0
      %v225 = vld [vmem:[#allocation7] sm:$0xff]
      %v226 = vld [vmem:[#allocation7 + $0x8] sm:$0xff]
      %v227 = vld [vmem:[#allocation7 + $0x10] sm:$0xff]
      %v228 = vld [vmem:[#allocation7 + $0x18] sm:$0xff]
      %v229 = vsub.f32 %v225, %v221
      %v230 = vsub.f32 %v226, %v222
      %v231 = vsub.f32 %v227, %v223
      %v232 = vsub.f32 %v228, %v224
      %233 = vst [vmem:[#allocation7] sm:$0xff] %v229
      %234 = vst [vmem:[#allocation7 + $0x8] sm:$0xff] %v230
      %235 = vst [vmem:[#allocation7 + $0x10] sm:$0xff] %v231
      %236 = vst [vmem:[#allocation7 + $0x18] sm:$0xff] %v232
    $region29: #{tpu_custom_call.1} parent=1 // pred_fallthru
      _
    // Predicated region
    $region30: #{tpu_custom_call.1} parent=1 // pred_check
      _
    $region31: #{tpu_custom_call.1} parent=1 // pred_check_branch
      %238 = sbr.rel (0) target = $region33
    $region32: #{tpu_custom_call.1} parent=1 // pred_region
      %s240 = ssub.s32 512, 512
      %241 = vsyncadd [#allocation4], %s240
      %s242 = sshll.u32 [#allocation7], 4
      %s243 = int_to_ptr.vmem [resolvable:$true] %s242
      %248 = dma.vmem_to_hbm [thread:$0]  %s243, 512, %s2, [#allocation4], 128, 128, 8
    $region33: #{tpu_custom_call.1} parent=1 // pred_fallthru
      _
    // Predicated region
    $region34: #{tpu_custom_call.1} parent=1 // pred_check
      _
    $region35: #{tpu_custom_call.1} parent=1 // pred_check_branch
      %250 = sbr.rel (0) target = $region37
    $region36: #{tpu_custom_call.1} parent=1 // pred_region
      %251 = dma.done [#allocation4], 512
    $region37: #{tpu_custom_call.1} parent=1 // pred_fallthru
      _
    %252 = vsyncpa [#allocation3], 1
    %253 = vsyncpa [#allocation6], 1
    %254 = vsyncpa [#allocation4], 1

</llo_original>
